<compile_context>
chip_gen: v6e
topology: v6e:2x2x1
jax: 0.10.0
libtpu: 0.0.40
codegen_flags: <defaults>
</compile_context>

<pallas_src>
import functools

import jax
import jax.numpy as jnp
from jax.experimental import pallas as pl
from jax.experimental.pallas import tpu as pltpu

LANE = 128      # vreg lane width
SUBLANE = 8     # vreg sublane count (f32)
MAX_TILE_N = 1024


def _round_up(x, m):
    return ((x + m - 1) // m) * m


# ----------------------------- kernel -------------------------------------- #

def _fused_mlp_kernel(x_ref, *refs, n_layers):
    """Whole MLP on one row-tile: bf16 matmul (f32 acc) + f32 bias + ReLU per
    hidden layer, then matmul + bias + softmax (true output width) at the end.
    Everything stays in VMEM."""
    o_ref = refs[-1]
    wb_refs = refs[:-1]

    h = x_ref[...]                                   # (tile_n, D_in) bf16
    for i in range(n_layers):
        w = wb_refs[2 * i][...]                      # (Din, Dout) bf16
        b = wb_refs[2 * i + 1][...]                  # (1, Dout) f32 (zero in padding)
        y = jnp.dot(h, w, preferred_element_type=jnp.float32) + b   # f32
        if i < n_layers - 1:
            # ReLU in f32, re-cast to bf16 to feed the next MXU pass.
            h = jnp.maximum(y, 0.0).astype(jnp.bfloat16)
        else:
            # Last layer is unpadded (true output_size lanes) -> plain stable
            # softmax over dim=1, no lane masking needed.
            m = jnp.max(y, axis=1, keepdims=True)
            e = jnp.exp(y - m)
            denom = jnp.sum(e, axis=1, keepdims=True)
            inv = pl.reciprocal(denom, approx=True)  # EUP vrcp (otherwise-idle slot)
            inv = inv * (2.0 - denom * inv)          # one Newton step -> f32 accuracy
            h = e * inv
    o_ref[...] = h


# ----------------------------- params --------------------------------------- #

def pad_params(params):
    """Prepare (W, b) per layer for the kernel:
       * hidden-layer out-features zero-padded to a multiple of 128 lanes
         (so the following layer's in-features are lane-dense),
       * the LAST layer keeps its true out-features (no output padding),
       * W cast to bf16 (MXU), b kept in f32 (VPU adds in f32)."""
    n_layers = len(params)
    padded = []
    for i, (w, b) in enumerate(params):
        din, dout = w.shape
        last = (i == n_layers - 1)
        din_p = din if i == 0 else _round_up(din, LANE)
        dout_p = dout if last else _round_up(dout, LANE)
        w_p = (jnp.zeros((din_p, dout_p), jnp.float32)
               .at[:din, :dout].set(w)
               .astype(jnp.bfloat16))
        b_p = jnp.zeros((1, dout_p), jnp.float32).at[:, :dout].set(b.reshape(1, dout))
        padded.append((w_p, b_p))
    return padded


# ----------------------------- wrapper -------------------------------------- #

def _choose_tile_n(n):
    """Biggest tile <= 1024 rows, but keep >=2 grid steps whenever N spans more
    than one tile so v7x's two TensorCores both get work and DMAs pipeline."""
    n8 = _round_up(max(n, 1), SUBLANE)
    if n8 <= SUBLANE:
        return SUBLANE
    return min(MAX_TILE_N, _round_up(pl.cdiv(n8, 2), SUBLANE))


@jax.jit
def mlp_forward(x, padded_params):
    """x: (N, input_size) f32 -> (N, output_size) softmax probabilities (f32)."""
    n, d_in = x.shape
    n_layers = len(padded_params)
    d_out = padded_params[-1][0].shape[1]            # true output width (unpadded)

    tile_n = _choose_tile_n(n)
    n_rows = _round_up(n, tile_n)

    x_b = x.astype(jnp.bfloat16)
    if n_rows != n:
        # Only the ragged remainder gets padded; exact-multiple batches pay nothing.
        x_b = jnp.pad(x_b, ((0, n_rows - n), (0, 0)))

    in_specs = [pl.BlockSpec((tile_n, d_in), lambda i: (i, 0))]
    flat_args = [x_b]
    for w_p, b_p in padded_params:
        # Constant index_map -> weight/bias blocks stay VMEM-resident across tiles.
        in_specs.append(pl.BlockSpec(w_p.shape, lambda i: (0, 0)))
        in_specs.append(pl.BlockSpec(b_p.shape, lambda i: (0, 0)))
        flat_args.extend([w_p, b_p])

    kernel = functools.partial(_fused_mlp_kernel, n_layers=n_layers)

    out_p = pl.pallas_call(
        kernel,
        out_shape=jax.ShapeDtypeStruct((n_rows, d_out), jnp.float32),
        grid=(n_rows // tile_n,),
        in_specs=in_specs,
        out_specs=pl.BlockSpec((tile_n, d_out), lambda i: (i, 0)),
        compiler_params=pltpu.CompilerParams(
            dimension_semantics=("parallel",),
        ),
    )(*flat_args)
    # TODO(synk): for a scaled-up model, tile the weight K/N dims on the grid,
    # budget against v7x's 64 MiB VMEM (constant-index specs still double-buffer;
    # use pipeline_mode=pl.Buffered(1) for weights) and set vmem_limit_bytes.
    return out_p[:n] if n_rows != n else out_p


# ----------------------------- model params --------------------------------- #

def init_mlp_params(key, input_size, hidden, output_size):
    """Deterministic params mimicking nn.Linear default init (U[-1/sqrt(fan_in), +])."""
    sizes = [input_size] + list(hidden) + [output_size]
    params = []
    for i in range(len(sizes) - 1):
        fan_in, fan_out = sizes[i], sizes[i + 1]
        key, kw, kb = jax.random.split(key, 3)
        bound = 1.0 / jnp.sqrt(jnp.float32(fan_in))
        w = jax.random.uniform(kw, (fan_in, fan_out), jnp.float32, -bound, bound)
        b = jax.random.uniform(kb, (1, fan_out), jnp.float32, -bound, bound)
        params.append((w, b))
    return params


def mlp_reference_f32(x, params):
    h = x
    for i, (w, b) in enumerate(params):
        h = h @ w + b
        if i < len(params) - 1:
            h = jnp.maximum(h, 0.0)
    return jax.nn.softmax(h, axis=1)


def mlp_reference_bf16(x, params):
    """Same precision recipe as the kernel (bf16 matmuls, f32 accumulate)."""
    h = x.astype(jnp.bfloat16)
    for i, (w, b) in enumerate(params):
        y = jnp.dot(h, w.astype(jnp.bfloat16),
                    preferred_element_type=jnp.float32) + b
        if i < len(params) - 1:
            h = jnp.maximum(y, 0.0).astype(jnp.bfloat16)
        else:
            h = jax.nn.softmax(y, axis=1)
    return h


# ----------------------------- main ------------------------------------------ #

if __name__ == "__main__":
    N = 8
    INPUT_SIZE = 32
    HIDDEN = [64, 32]
    OUTPUT_SIZE = 16

    key = jax.random.PRNGKey(0)
    key, kx = jax.random.split(key)
    x = jax.random.normal(kx, (N, INPUT_SIZE), dtype=jnp.float32)

    params = init_mlp_params(key, INPUT_SIZE, HIDDEN, OUTPUT_SIZE)
    padded_params = pad_params(params)

    out = mlp_forward(x, padded_params)
    out = jax.block_until_ready(out)

    assert out.shape == (N, OUTPUT_SIZE)
    # Match the same-precision (bf16 matmul, f32 acc) reference tightly.
    ref_bf16 = mlp_reference_bf16(x, params)
    assert jnp.allclose(out, ref_bf16, atol=1e-3, rtol=1e-3)
    # Match the full-f32 reference within bf16 tolerance.
    ref_f32 = mlp_reference_f32(x, params)
    assert jnp.allclose(out, ref_f32, atol=2e-2, rtol=2e-2)
    # Softmax rows sum to 1.
    assert jnp.allclose(jnp.sum(out, axis=1), jnp.ones((N,)), atol=1e-5)

    print("KERNEL_OK")
</pallas_src>

<mosaic_0001>
module attributes {stable_mosaic.version = 11 : i64} {
  func.func @_fused_mlp_kernel(%arg0: i32, %arg1: memref<8x32xbf16, #tpu.memory_space<vmem>>, %arg2: memref<32x128xbf16, #tpu.memory_space<vmem>>, %arg3: memref<1x128xf32, #tpu.memory_space<vmem>>, %arg4: memref<128x128xbf16, #tpu.memory_space<vmem>>, %arg5: memref<1x128xf32, #tpu.memory_space<vmem>>, %arg6: memref<128x16xbf16, #tpu.memory_space<vmem>>, %arg7: memref<1x16xf32, #tpu.memory_space<vmem>>, %arg8: memref<8x16xf32, #tpu.memory_space<vmem>>) attributes {dimension_semantics = [#tpu.dimension_semantics<parallel>], iteration_bounds = array<i64: 1>, scalar_prefetch = 0 : i64, scratch_operands = 0 : i64, tpu.core_type = #tpu.core_type<tc>, window_params = [{transform_indices = @transform_0, window_bounds = array<i64: 8, 32>}, {pipeline_mode = #tpu.pipeline_mode<synchronous>, transform_indices = @transform_1, window_bounds = array<i64: 32, 128>}, {pipeline_mode = #tpu.pipeline_mode<synchronous>, transform_indices = @transform_2, window_bounds = array<i64: 1, 128>}, {pipeline_mode = #tpu.pipeline_mode<synchronous>, transform_indices = @transform_3, window_bounds = array<i64: 128, 128>}, {pipeline_mode = #tpu.pipeline_mode<synchronous>, transform_indices = @transform_4, window_bounds = array<i64: 1, 128>}, {pipeline_mode = #tpu.pipeline_mode<synchronous>, transform_indices = @transform_5, window_bounds = array<i64: 128, 16>}, {pipeline_mode = #tpu.pipeline_mode<synchronous>, transform_indices = @transform_6, window_bounds = array<i64: 1, 16>}, {transform_indices = @transform_7, window_bounds = array<i64: 8, 16>}]} {
    %c0 = arith.constant 0 : index
    %c0_0 = arith.constant 0 : index
    %0 = vector.load %arg1[%c0, %c0_0] : memref<8x32xbf16, #tpu.memory_space<vmem>>, vector<8x32xbf16>
    %c0_1 = arith.constant 0 : index
    %c0_2 = arith.constant 0 : index
    %1 = vector.load %arg2[%c0_1, %c0_2] : memref<32x128xbf16, #tpu.memory_space<vmem>>, vector<32x128xbf16>
    %c0_3 = arith.constant 0 : index
    %c0_4 = arith.constant 0 : index
    %2 = vector.load %arg3[%c0_3, %c0_4] : memref<1x128xf32, #tpu.memory_space<vmem>>, vector<1x128xf32>
    %cst = arith.constant dense<0.000000e+00> : vector<8x128xf32>
    %3 = tpu.matmul %0, %1, %cst {dimension_numbers = #tpu.dot_dimension_numbers<[1], [0], [0], [1], [0, 0, 1, 1], [], []>} : vector<8x32xbf16>, vector<32x128xbf16>, vector<8x128xf32> -> vector<8x128xf32>
    %4 = vector.broadcast %2 : vector<1x128xf32> to vector<8x128xf32>
    %5 = arith.addf %3, %4 : vector<8x128xf32>
    %cst_5 = arith.constant 0.000000e+00 : f32
    %6 = vector.broadcast %cst_5 : f32 to vector<8x128xf32>
    %7 = arith.maximumf %5, %6 : vector<8x128xf32>
    %8 = arith.truncf %7 : vector<8x128xf32> to vector<8x128xbf16>
    %c0_6 = arith.constant 0 : index
    %c0_7 = arith.constant 0 : index
    %9 = vector.load %arg4[%c0_6, %c0_7] : memref<128x128xbf16, #tpu.memory_space<vmem>>, vector<128x128xbf16>
    %c0_8 = arith.constant 0 : index
    %c0_9 = arith.constant 0 : index
    %10 = vector.load %arg5[%c0_8, %c0_9] : memref<1x128xf32, #tpu.memory_space<vmem>>, vector<1x128xf32>
    %cst_10 = arith.constant dense<0.000000e+00> : vector<8x128xf32>
    %11 = tpu.matmul %8, %9, %cst_10 {dimension_numbers = #tpu.dot_dimension_numbers<[1], [0], [0], [1], [0, 0, 1, 1], [], []>} : vector<8x128xbf16>, vector<128x128xbf16>, vector<8x128xf32> -> vector<8x128xf32>
    %12 = vector.broadcast %10 : vector<1x128xf32> to vector<8x128xf32>
    %13 = arith.addf %11, %12 : vector<8x128xf32>
    %cst_11 = arith.constant 0.000000e+00 : f32
    %14 = vector.broadcast %cst_11 : f32 to vector<8x128xf32>
    %15 = arith.maximumf %13, %14 : vector<8x128xf32>
    %16 = arith.truncf %15 : vector<8x128xf32> to vector<8x128xbf16>
    %c0_12 = arith.constant 0 : index
    %c0_13 = arith.constant 0 : index
    %17 = vector.load %arg6[%c0_12, %c0_13] : memref<128x16xbf16, #tpu.memory_space<vmem>>, vector<128x16xbf16>
    %c0_14 = arith.constant 0 : index
    %c0_15 = arith.constant 0 : index
    %18 = vector.load %arg7[%c0_14, %c0_15] : memref<1x16xf32, #tpu.memory_space<vmem>>, vector<1x16xf32>
    %cst_16 = arith.constant dense<0.000000e+00> : vector<8x16xf32>
    %19 = tpu.matmul %16, %17, %cst_16 {dimension_numbers = #tpu.dot_dimension_numbers<[1], [0], [0], [1], [0, 0, 1, 1], [], []>} : vector<8x128xbf16>, vector<128x16xbf16>, vector<8x16xf32> -> vector<8x16xf32>
    %20 = vector.broadcast %18 : vector<1x16xf32> to vector<8x16xf32>
    %21 = arith.addf %19, %20 : vector<8x16xf32>
    %cst_17 = arith.constant dense<0xFF800000> : vector<8xf32>
    %22 = vector.multi_reduction <maximumf>, %21, %cst_17 [1] : vector<8x16xf32> to vector<8xf32>
    %23 = vector.shape_cast %22 : vector<8xf32> to vector<8x1xf32>
    %24 = vector.broadcast %23 : vector<8x1xf32> to vector<8x16xf32>
    %25 = arith.subf %21, %24 : vector<8x16xf32>
    %26 = math.exp %25 : vector<8x16xf32>
    %cst_18 = arith.constant dense<0.000000e+00> : vector<8xf32>
    %27 = vector.multi_reduction <add>, %26, %cst_18 [1] : vector<8x16xf32> to vector<8xf32>
    %28 = vector.shape_cast %27 : vector<8xf32> to vector<8x1xf32>
    %29 = tpu.reciprocal %28 {approx = true} : vector<8x1xf32> -> vector<8x1xf32>
    %30 = arith.mulf %28, %29 : vector<8x1xf32>
    %cst_19 = arith.constant 2.000000e+00 : f32
    %31 = vector.broadcast %cst_19 : f32 to vector<8x1xf32>
    %32 = arith.subf %31, %30 : vector<8x1xf32>
    %33 = arith.mulf %29, %32 : vector<8x1xf32>
    %34 = vector.broadcast %33 : vector<8x1xf32> to vector<8x16xf32>
    %35 = arith.mulf %26, %34 : vector<8x16xf32>
    %c0_20 = arith.constant 0 : index
    %c0_21 = arith.constant 0 : index
    %36 = vector.load %arg8[%c0_20, %c0_21] : memref<8x16xf32, #tpu.memory_space<vmem>>, vector<8x16xf32>
    tpu.vector_store %arg8[%c0_20, %c0_21], %35 {strides = array<i32>} : memref<8x16xf32, #tpu.memory_space<vmem>>, vector<8x16xf32>,
    return
  }
  func.func @transform_0(%arg0: i32) -> (i32, i32) {
    %c0_i32 = arith.constant 0 : i32
    %c0_i32_0 = arith.constant 0 : i32
    return %arg0, %c0_i32 : i32, i32
  }
  func.func @transform_1(%arg0: i32) -> (i32, i32) {
    %c0_i32 = arith.constant 0 : i32
    %c0_i32_0 = arith.constant 0 : i32
    %c0_i32_1 = arith.constant 0 : i32
    return %c0_i32, %c0_i32_0 : i32, i32
  }
  func.func @transform_2(%arg0: i32) -> (i32, i32) {
    %c0_i32 = arith.constant 0 : i32
    %c0_i32_0 = arith.constant 0 : i32
    %c0_i32_1 = arith.constant 0 : i32
    return %c0_i32, %c0_i32_0 : i32, i32
  }
  func.func @transform_3(%arg0: i32) -> (i32, i32) {
    %c0_i32 = arith.constant 0 : i32
    %c0_i32_0 = arith.constant 0 : i32
    %c0_i32_1 = arith.constant 0 : i32
    return %c0_i32, %c0_i32_0 : i32, i32
  }
  func.func @transform_4(%arg0: i32) -> (i32, i32) {
    %c0_i32 = arith.constant 0 : i32
    %c0_i32_0 = arith.constant 0 : i32
    %c0_i32_1 = arith.constant 0 : i32
    return %c0_i32, %c0_i32_0 : i32, i32
  }
  func.func @transform_5(%arg0: i32) -> (i32, i32) {
    %c0_i32 = arith.constant 0 : i32
    %c0_i32_0 = arith.constant 0 : i32
    %c0_i32_1 = arith.constant 0 : i32
    return %c0_i32, %c0_i32_0 : i32, i32
  }
  func.func @transform_6(%arg0: i32) -> (i32, i32) {
    %c0_i32 = arith.constant 0 : i32
    %c0_i32_0 = arith.constant 0 : i32
    %c0_i32_1 = arith.constant 0 : i32
    return %c0_i32, %c0_i32_0 : i32, i32
  }
  func.func @transform_7(%arg0: i32) -> (i32, i32) {
    %c0_i32 = arith.constant 0 : i32
    %c0_i32_0 = arith.constant 0 : i32
    return %arg0, %c0_i32 : i32, i32
  }
}

</mosaic_0001>

<llo_original>
// kernel: mlp_forward.1
$region0: #{mlp_forward.1}
  #allocation0 [shape = 'u32[]', space=smem, size = 0x4, offset = 0x4, fixed_abs, tag = 'smem constant byte address 0x4 - core index']
  #allocation1 [shape = 'u32[144,128]{1,0:T(1,128)}', space=vmem, size = 0x12000, scoped, tag = 'internal scratch']
  %s0 = inlined_call_operand.vmem [shape: bf16[8,32], index: 0, kind: input, shape index: {}]
  %s1 = inlined_call_operand.vmem [shape: bf16[32,128], index: 1, kind: input, shape index: {}]
  %s2 = inlined_call_operand.vmem [shape: f32[1,128], index: 2, kind: input, shape index: {}]
  %s3 = inlined_call_operand.vmem [shape: bf16[128,128], index: 3, kind: input, shape index: {}]
  %s4 = inlined_call_operand.vmem [shape: f32[1,128], index: 4, kind: input, shape index: {}]
  %s5 = inlined_call_operand.vmem [shape: bf16[128,16], index: 5, kind: input, shape index: {}]
  %s6 = inlined_call_operand.vmem [shape: f32[1,16], index: 6, kind: input, shape index: {}]
  %s7 = inlined_call_operand.hbm [shape: f32[8,16], index: 7, kind: output, shape index: {}]
  %s8 = sld [smem:[#allocation0]]
  $region38: #{mlp_forward.1} parent=0
    _
  %s10 = ssub.s32 1, %s8
  %s11 = scalar_select 0, %s10, %s8
  $region1: #{mlp_forward.1} parent=0
    #allocation2 [shape = 'u8[4096]{0}', space=vmem, size = 0x1000, scoped, tag = 'output window, operand 0, single buffered']
    #allocation3 [shape = 's32[1]{0}', space=sflag, size = 0x4, scoped, tag = 'scoped memory for mlp_forward.1']
    %12 = vsyncpa [#allocation3], 0
    // Predicated region
    $region2: #{mlp_forward.1} parent=1 // pred_check
      _
    $region3: #{mlp_forward.1} parent=1 // pred_check_branch
      %14 = sbr.rel (0) target = $region5
    $region4: #{mlp_forward.1} parent=1 // pred_region
      _
    $region5: #{mlp_forward.1} parent=1 // pred_fallthru
      _
    // Predicated region
    $region6: #{mlp_forward.1} parent=1 // pred_check
      _
    $region7: #{mlp_forward.1} parent=1 // pred_check_branch
      %16 = sbr.rel (0) target = $region9
    $region8: #{mlp_forward.1} parent=1 // pred_region
      _
    $region9: #{mlp_forward.1} parent=1 // pred_fallthru
      _
    // Predicated region
    $region10: #{mlp_forward.1} parent=1 // pred_check
      _
    $region11: #{mlp_forward.1} parent=1 // pred_check_branch
      %18 = sbr.rel (0) target = $region13
    $region12: #{mlp_forward.1} parent=1 // pred_region
      _
    $region13: #{mlp_forward.1} parent=1 // pred_fallthru
      _
    // Predicated region
    $region14: #{mlp_forward.1} parent=1 // pred_check
      _
    $region15: #{mlp_forward.1} parent=1 // pred_check_branch
      %20 = sbr.rel (0) target = $region17
    $region16: #{mlp_forward.1} parent=1 // pred_region
      _
    $region17: #{mlp_forward.1} parent=1 // pred_fallthru
      _
    // Predicated region
    $region18: #{mlp_forward.1} parent=1 // pred_check
      _
    $region19: #{mlp_forward.1} parent=1 // pred_check_branch
      %22 = sbr.rel (0) target = $region21
    $region20: #{mlp_forward.1} parent=1 // pred_region
      _
    $region21: #{mlp_forward.1} parent=1 // pred_fallthru
      _
    // Predicated region
    $region22: #{mlp_forward.1} parent=1 // pred_check
      _
    $region23: #{mlp_forward.1} parent=1 // pred_check_branch
      %24 = sbr.rel (0) target = $region25
    $region24: #{mlp_forward.1} parent=1 // pred_region
      _
    $region25: #{mlp_forward.1} parent=1 // pred_fallthru
      _
    // Predicated region
    $region26: #{mlp_forward.1} parent=1 // pred_check
      _
    $region27: #{mlp_forward.1} parent=1 // pred_check_branch
      %26 = sbr.rel (0) target = $region29
    $region28: #{mlp_forward.1} parent=1 // pred_region
      _
    $region29: #{mlp_forward.1} parent=1 // pred_fallthru
      _
    %v28 = vld [vmem:[%s0] sm:$0xf]
    %v29 = vld [vmem:[%s1] sm:$0xf]
    %v30 = vld [vmem:[%s1 + $0x4] sm:$0xf]
    %v31 = vld [vmem:[%s1 + $0x8] sm:$0xf]
    %v32 = vld [vmem:[%s1 + $0xc] sm:$0xf]
    %v33 = vld [vmem:[%s2] sm:$0x1]
    %v35 = vlaneseq
    %v36 = vshrl.u32 %v35, 7
    %v37 = vsub.s32 0, %v36
    %v38 = vrot.slane %v33, %v37
    %v44 = vunpack.c.l.b16 %v29
    %v45 = vunpack.c.l.b16 %v30
    %v46 = vunpack.c.l.b16 %v31
    %v47 = vunpack.c.l.b16 %v32
    %v48 = vpack.c.b16 %v45, %v44
    %v49 = vpack.c.b16 %v47, %v46
    %vm52 = vcmask 261120
    %v54 = vsel %vm52, %v28, 0
    %56 = vmatprep.subr.bf16.mxu0 0
    %57 = vmatpush1.bf16.msra.mxu0 0
    %58 = vmatprep.subr.bf16.mxu0 0
    %59 = vmatpush1.bf16.msra.mxu0 0
    %60 = vmatprep.subr.bf16.mxu0 0
    %61 = vmatpush1.bf16.msra.mxu0 0
    %62 = vmatprep.subr.bf16.mxu0 0
    %63 = vmatpush1.bf16.msra.mxu0 0
    %64 = vmatprep.subr.bf16.mxu0 0
    %65 = vmatpush1.bf16.msra.mxu0 0
    %66 = vmatprep.subr.bf16.mxu0 0
    %67 = vmatpush1.bf16.msra.mxu0 0
    %68 = vmatprep.subr.bf16.mxu0 0
    %69 = vmatpush1.bf16.msra.mxu0 %v49
    %70 = vmatprep.subr.bf16.mxu0 0
    %71 = vmatpush1.bf16.msra.mxu0 %v48
    %72 = vmatprep.subr.bf16.mxu0 0
    %73 = vmatpush2.bf16.msra.mxu0 0
    %74 = vmatprep.subr.bf16.mxu0 0
    %75 = vmatpush2.bf16.msra.mxu0 0
    %76 = vmatprep.subr.bf16.mxu0 0
    %77 = vmatpush2.bf16.msra.mxu0 0
    %78 = vmatprep.subr.bf16.mxu0 0
    %79 = vmatpush2.bf16.msra.mxu0 0
    %80 = vmatprep.subr.bf16.mxu0 0
    %81 = vmatpush2.bf16.msra.mxu0 0
    %82 = vmatprep.subr.bf16.mxu0 0
    %83 = vmatpush2.bf16.msra.mxu0 0
    %84 = vmatprep.subr.bf16.mxu0 0
    %85 = vmatpush2.bf16.msra.mxu0 0
    %86 = vmatprep.subr.bf16.mxu0 0
    %87 = vmatpush2.bf16.msra.mxu0 0
    %88 = vmatprep.mubr.bf16.mxu0 0
    %89 = vmatmul.mubr.bf16.gmra.mxu0 %v54
    %v90 = vpop.f32.mrf.mxu0
    %v91 = vadd.f32 %v38, %v90
    %v92 = vpop.f32.mrf.mxu0
    %v93 = vpop.f32.mrf.mxu0
    %v94 = vpop.f32.mrf.mxu0
    %95 = vdwg.mxu0
    %v96 = vmax.f32 %v91, 0.0
    %v97 = vpack.c.bf16 %v96, %v96
    %v98 = vld [vmem:[%s3] sm:$0xf]
    %v99 = vld [vmem:[%s3 + $0x4] sm:$0xf]
    %v100 = vld [vmem:[%s3 + $0x8] sm:$0xf]
    %v101 = vld [vmem:[%s3 + $0xc] sm:$0xf]
    %v102 = vld [vmem:[%s3 + $0x10] sm:$0xf]
    %v103 = vld [vmem:[%s3 + $0x14] sm:$0xf]
    %v104 = vld [vmem:[%s3 + $0x18] sm:$0xf]
    %v105 = vld [vmem:[%s3 + $0x1c] sm:$0xf]
    %v106 = vld [vmem:[%s3 + $0x20] sm:$0xf]
    %v107 = vld [vmem:[%s3 + $0x24] sm:$0xf]
    %v108 = vld [vmem:[%s3 + $0x28] sm:$0xf]
    %v109 = vld [vmem:[%s3 + $0x2c] sm:$0xf]
    %v110 = vld [vmem:[%s3 + $0x30] sm:$0xf]
    %v111 = vld [vmem:[%s3 + $0x34] sm:$0xf]
    %v112 = vld [vmem:[%s3 + $0x38] sm:$0xf]
    %v113 = vld [vmem:[%s3 + $0x3c] sm:$0xf]
    %v114 = vld [vmem:[%s4] sm:$0x1]
    %v116 = vlaneseq
    %v117 = vshrl.u32 %v116, 7
    %v118 = vsub.s32 0, %v117
    %v119 = vrot.slane %v114, %v118
    %v137 = vunpack.c.l.b16 %v98
    %v138 = vunpack.c.l.b16 %v99
    %v139 = vunpack.c.l.b16 %v100
    %v140 = vunpack.c.l.b16 %v101
    %v141 = vunpack.c.l.b16 %v102
    %v142 = vunpack.c.l.b16 %v103
    %v143 = vunpack.c.l.b16 %v104
    %v144 = vunpack.c.l.b16 %v105
    %v145 = vunpack.c.l.b16 %v106
    %v146 = vunpack.c.l.b16 %v107
    %v147 = vunpack.c.l.b16 %v108
    %v148 = vunpack.c.l.b16 %v109
    %v149 = vunpack.c.l.b16 %v110
    %v150 = vunpack.c.l.b16 %v111
    %v151 = vunpack.c.l.b16 %v112
    %v152 = vunpack.c.l.b16 %v113
    %v153 = vpack.c.b16 %v138, %v137
    %v154 = vpack.c.b16 %v140, %v139
    %v155 = vpack.c.b16 %v142, %v141
    %v156 = vpack.c.b16 %v144, %v143
    %v157 = vpack.c.b16 %v146, %v145
    %v158 = vpack.c.b16 %v148, %v147
    %v159 = vpack.c.b16 %v150, %v149
    %v160 = vpack.c.b16 %v152, %v151
    %169 = vmatprep.subr.bf16.mxu0 0
    %170 = vmatpush1.bf16.msra.mxu0 %v160
    %171 = vmatprep.subr.bf16.mxu0 0
    %172 = vmatpush1.bf16.msra.mxu0 %v159
    %173 = vmatprep.subr.bf16.mxu0 0
    %174 = vmatpush1.bf16.msra.mxu0 %v158
    %175 = vmatprep.subr.bf16.mxu0 0
    %176 = vmatpush1.bf16.msra.mxu0 %v157
    %177 = vmatprep.subr.bf16.mxu0 0
    %178 = vmatpush1.bf16.msra.mxu0 %v156
    %179 = vmatprep.subr.bf16.mxu0 0
    %180 = vmatpush1.bf16.msra.mxu0 %v155
    %181 = vmatprep.subr.bf16.mxu0 0
    %182 = vmatpush1.bf16.msra.mxu0 %v154
    %183 = vmatprep.subr.bf16.mxu0 0
    %184 = vmatpush1.bf16.msra.mxu0 %v153
    %185 = vmatprep.subr.bf16.mxu0 0
    %186 = vmatpush2.bf16.msra.mxu0 0
    %187 = vmatprep.subr.bf16.mxu0 0
    %188 = vmatpush2.bf16.msra.mxu0 0
    %189 = vmatprep.subr.bf16.mxu0 0
    %190 = vmatpush2.bf16.msra.mxu0 0
    %191 = vmatprep.subr.bf16.mxu0 0
    %192 = vmatpush2.bf16.msra.mxu0 0
    %193 = vmatprep.subr.bf16.mxu0 0
    %194 = vmatpush2.bf16.msra.mxu0 0
    %195 = vmatprep.subr.bf16.mxu0 0
    %196 = vmatpush2.bf16.msra.mxu0 0
    %197 = vmatprep.subr.bf16.mxu0 0
    %198 = vmatpush2.bf16.msra.mxu0 0
    %199 = vmatprep.subr.bf16.mxu0 0
    %200 = vmatpush2.bf16.msra.mxu0 0
    %201 = vmatprep.mubr.bf16.mxu0 0
    %202 = vmatmul.mubr.bf16.gmra.mxu0 %v97
    %v203 = vpop.f32.mrf.mxu0
    %v204 = vadd.f32 %v119, %v203
    %v205 = vpop.f32.mrf.mxu0
    %v206 = vpop.f32.mrf.mxu0
    %v207 = vpop.f32.mrf.mxu0
    %208 = vdwg.mxu0
    %v209 = vmax.f32 %v204, 0.0
    %v210 = vpack.c.bf16 %v209, %v209
    %v211 = vld [vmem:[%s5] sm:$0xf]
    %v212 = vld [vmem:[%s5 + $0x4] sm:$0xf]
    %v213 = vld [vmem:[%s5 + $0x8] sm:$0xf]
    %v214 = vld [vmem:[%s5 + $0xc] sm:$0xf]
    %v215 = vld [vmem:[%s5 + $0x10] sm:$0xf]
    %v216 = vld [vmem:[%s5 + $0x14] sm:$0xf]
    %v217 = vld [vmem:[%s5 + $0x18] sm:$0xf]
    %v218 = vld [vmem:[%s5 + $0x1c] sm:$0xf]
    %v219 = vld [vmem:[%s5 + $0x20] sm:$0xf]
    %v220 = vld [vmem:[%s5 + $0x24] sm:$0xf]
    %v221 = vld [vmem:[%s5 + $0x28] sm:$0xf]
    %v222 = vld [vmem:[%s5 + $0x2c] sm:$0xf]
    %v223 = vld [vmem:[%s5 + $0x30] sm:$0xf]
    %v224 = vld [vmem:[%s5 + $0x34] sm:$0xf]
    %v225 = vld [vmem:[%s5 + $0x38] sm:$0xf]
    %v226 = vld [vmem:[%s5 + $0x3c] sm:$0xf]
    %v227 = vld [vmem:[%s6] sm:$0x1]
    %v229 = vlaneseq
    %v230 = vshrl.u32 %v229, 7
    %v231 = vsub.s32 0, %v230
    %v232 = vrot.slane %v227, %v231
    %v250 = vunpack.c.l.b16 %v211
    %v251 = vunpack.c.l.b16 %v212
    %v252 = vunpack.c.l.b16 %v213
    %v253 = vunpack.c.l.b16 %v214
    %v254 = vunpack.c.l.b16 %v215
    %v255 = vunpack.c.l.b16 %v216
    %v256 = vunpack.c.l.b16 %v217
    %v257 = vunpack.c.l.b16 %v218
    %v258 = vunpack.c.l.b16 %v219
    %v259 = vunpack.c.l.b16 %v220
    %v260 = vunpack.c.l.b16 %v221
    %v261 = vunpack.c.l.b16 %v222
    %v262 = vunpack.c.l.b16 %v223
    %v263 = vunpack.c.l.b16 %v224
    %v264 = vunpack.c.l.b16 %v225
    %v265 = vunpack.c.l.b16 %v226
    %v266 = vpack.c.b16 %v251, %v250
    %v267 = vpack.c.b16 %v253, %v252
    %v268 = vpack.c.b16 %v255, %v254
    %v269 = vpack.c.b16 %v257, %v256
    %v270 = vpack.c.b16 %v259, %v258
    %v271 = vpack.c.b16 %v261, %v260
    %v272 = vpack.c.b16 %v263, %v262
    %v273 = vpack.c.b16 %v265, %v264
    %282 = vmatprep.subr.bf16.mxu0 0
    %283 = vmatpush1.bf16.msra.mxu0 %v273
    %284 = vmatprep.subr.bf16.mxu0 0
    %285 = vmatpush1.bf16.msra.mxu0 %v272
    %286 = vmatprep.subr.bf16.mxu0 0
    %287 = vmatpush1.bf16.msra.mxu0 %v271
    %288 = vmatprep.subr.bf16.mxu0 0
    %289 = vmatpush1.bf16.msra.mxu0 %v270
    %290 = vmatprep.subr.bf16.mxu0 0
    %291 = vmatpush1.bf16.msra.mxu0 %v269
    %292 = vmatprep.subr.bf16.mxu0 0
    %293 = vmatpush1.bf16.msra.mxu0 %v268
    %294 = vmatprep.subr.bf16.mxu0 0
    %295 = vmatpush1.bf16.msra.mxu0 %v267
    %296 = vmatprep.subr.bf16.mxu0 0
    %297 = vmatpush1.bf16.msra.mxu0 %v266
    %298 = vmatprep.subr.bf16.mxu0 0
    %299 = vmatpush2.bf16.msra.mxu0 0
    %300 = vmatprep.subr.bf16.mxu0 0
    %301 = vmatpush2.bf16.msra.mxu0 0
    %302 = vmatprep.subr.bf16.mxu0 0
    %303 = vmatpush2.bf16.msra.mxu0 0
    %304 = vmatprep.subr.bf16.mxu0 0
    %305 = vmatpush2.bf16.msra.mxu0 0
    %306 = vmatprep.subr.bf16.mxu0 0
    %307 = vmatpush2.bf16.msra.mxu0 0
    %308 = vmatprep.subr.bf16.mxu0 0
    %309 = vmatpush2.bf16.msra.mxu0 0
    %310 = vmatprep.subr.bf16.mxu0 0
    %311 = vmatpush2.bf16.msra.mxu0 0
    %312 = vmatprep.subr.bf16.mxu0 0
    %313 = vmatpush2.bf16.msra.mxu0 0
    %314 = vmatprep.mubr.bf16.mxu0 0
    %315 = vmatmul.mubr.bf16.gmra.mxu0 %v210
    %v316 = vpop.f32.mrf.mxu0
    %v317 = vadd.f32 %v232, %v316
    %v318 = vpop.f32.mrf.mxu0
    %v319 = vpop.f32.mrf.mxu0
    %v320 = vpop.f32.mrf.mxu0
    %321 = vdwg.mxu0
    %vm322 = vcmask 130048
    %v323 = vsel %vm322, %v317, -inf
    %324 = vmax.xlane.f32.xlu0 %v323
    %v325 = vpop.xlane.xlu0 %324
    %v326 = vsub.f32 %v317, %v325
    %v327 = vmul.f32 %v326, 1.442695
    %v328 = vpow.pop %v327
    %v329 = vsel %vm322, %v328, 0.0
    %330 = vadd.xlane.f32.xlu0 %v329
    %v331 = vpop.xlane.xlu0 %330
    %v332 = vrcp.pop %v331
    %v333 = vmul.f32 %v331, %v332
    %v334 = vsub.f32 2.0, %v333
    %v335 = vmul.f32 %v332, %v334
    %v336 = vmul.f32 %v328, %v335
    %337 = vst.msk [vmem:[#allocation2] sm:$0xff] %vm322, %v336
    // Predicated region
    $region30: #{mlp_forward.1} parent=1 // pred_check
      _
    $region31: #{mlp_forward.1} parent=1 // pred_check_branch
      %339 = sbr.rel (0) target = $region33
    $region32: #{mlp_forward.1} parent=1 // pred_region
      %s341 = ssub.s32 128, 128
      %342 = vsyncadd [#allocation3], %s341
      %s344 = sshll.u32 [#allocation2], 4
      %s345 = int_to_ptr.vmem [resolvable:$true] %s344
      %347 = dma.vmem_to_hbm [thread:$0]  %s345, 128, %s7, [#allocation3]
    $region33: #{mlp_forward.1} parent=1 // pred_fallthru
      _
    // Predicated region
    $region34: #{mlp_forward.1} parent=1 // pred_check
      _
    $region35: #{mlp_forward.1} parent=1 // pred_check_branch
      %349 = sbr.rel (0) target = $region37
    $region36: #{mlp_forward.1} parent=1 // pred_region
      %350 = dma.done [#allocation3], 128
    $region37: #{mlp_forward.1} parent=1 // pred_fallthru
      _
    %351 = vsyncpa [#allocation3], 1

</llo_original>
